<compile_context>
chip_gen: v7x
topology: tpu7x:2x2x1
jax: 0.10.0
libtpu: 0.0.40
codegen_flags: <defaults>
</compile_context>

<pallas_src>
import functools

import jax
import jax.numpy as jnp
import numpy as np
from jax.experimental import pallas as pl
from jax.experimental.pallas import tpu as pltpu

LANE = 128   # pad every feature dim to a multiple of this (lane-dense stores)
SUB = 8      # f32 sublane tile


def _round_up(v, m):
    return ((v + m - 1) // m) * m


def _pad2(a, rows, cols, dtype=None):
    a = jnp.pad(a, ((0, rows - a.shape[0]), (0, cols - a.shape[1])))
    return a if dtype is None else a.astype(dtype)


def bn_fold(gamma, beta, mean, var, eps=1e-5):
    """Fold eval-mode BatchNorm1d into per-feature (scale, shift)."""
    scale = gamma / jnp.sqrt(var + eps)
    shift = beta - mean * scale
    return scale[None, :], shift[None, :]


# ---------------------------------------------------------------------------
# Fused forward kernel (one grid step per batch tile):
#   a0  = relu(x  @ W0 + b0)                 block0  (pre/post BN folded)
#   z   = a0 @ [W1b | W1s] + [b1b | b1s]     residual branch + skip, 1 matmul
#   h1  = relu(z_b) * s1b + t1b + z_s        branch post-BN + residual add
#   out = h1 @ W2 + b2                       final linear
# ---------------------------------------------------------------------------
def _fused_kernel(x_ref, w0_ref, b0_ref, wc_ref, bc_ref, s1_ref, t1_ref,
                  w2_ref, b2_ref, o_ref, *, f2p):
    bf16 = jnp.bfloat16
    f32 = jnp.float32

    x = x_ref[...]                                                # (TB, F0P) bf16
    a0 = jnp.dot(x, w0_ref[...], preferred_element_type=f32) + b0_ref[...]
    a0 = jnp.maximum(a0, 0.0)                                     # (TB, F1P) f32

    z = jnp.dot(a0.astype(bf16), wc_ref[...],
                preferred_element_type=f32) + bc_ref[...]         # (TB, 2*F2P)
    zb = z[:, :f2p]                                               # branch pre-act
    zs = z[:, f2p:]                                               # skip path
    h1 = jnp.maximum(zb, 0.0) * s1_ref[...] + t1_ref[...] + zs    # fx + skip

    out = jnp.dot(h1.astype(bf16), w2_ref[...],
                  preferred_element_type=f32) + b2_ref[...]       # (TB, F3P)
    o_ref[...] = out


# ---------------------------------------------------------------------------
# Wrapper-side folding: BN affines + biases into weights, pad, cast to bf16.
# ---------------------------------------------------------------------------
def fold_and_pad_params(params, n_emb):
    f32 = jnp.float32
    bf16 = jnp.bfloat16
    W0, W1b, W1s, W2 = params["w0"], params["w1b"], params["w1s"], params["w2"]
    F0, F1 = W0.shape
    F2 = W1b.shape[1]
    F3 = W2.shape[1]
    F0P, F1P, F2P, F3P = (_round_up(f, LANE) for f in (F0, F1, F2, F3))

    # bn_cont (continuous features only) folded into W0 / b0.
    cs, ch = bn_fold(**params["bn_cont"])
    prs = jnp.concatenate([jnp.ones((1, n_emb), f32), cs], axis=1)     # (1, F0)
    prh = jnp.concatenate([jnp.zeros((1, n_emb), f32), ch], axis=1)
    W0f = W0 * prs.T
    b0f = prh @ W0                                                     # (1, F1)

    # block0 post-BN folded into the NEXT layer's weights (ReLU commutes out).
    s0, t0 = bn_fold(**params["bn0"])                                  # (1, F1)
    # residual branch: Linear(no bias) -> ReLU -> BN
    s1b, t1b = bn_fold(**params["bn1b"])                               # (1, F2)
    W1bf = W1b * s0.T
    b1bf = t0 @ W1b
    # skip path: BN -> Linear(no bias)
    s1s, t1s = bn_fold(**params["bn1s"])                               # (1, F1)
    W1sf = W1s * (s0 * s1s).T
    b1sf = (t0 * s1s + t1s) @ W1s
    # final linear (bias, no BN)
    b2 = params["b2"]

    folded = dict(
        w0=_pad2(W0f, F0P, F1P, bf16),
        b0=_pad2(b0f, 1, F1P),
        wc=jnp.concatenate([_pad2(W1bf, F1P, F2P, bf16),
                            _pad2(W1sf, F1P, F2P, bf16)], axis=1),
        bc=jnp.concatenate([_pad2(b1bf, 1, F2P),
                            _pad2(b1sf, 1, F2P)], axis=1),
        s1=_pad2(s1b, 1, F2P),
        t1=_pad2(t1b, 1, F2P),
        w2=_pad2(W2, F2P, F3P, bf16),
        b2=_pad2(b2, 1, F3P),
    )
    return folded, (F0P, F1P, F2P, F3, F3P)


def forward_pallas(params, x_cat, x_cont):
    # Embedding gather + concat stay in JAX (eval mode, emb_drop = identity).
    # TODO(synk): per-row embedding gather is data-dependent; at these tiny
    # table sizes an in-kernel scalar-prefetch gather is not worthwhile.
    embs = [jnp.take(E, x_cat[:, i], axis=0)
            for i, E in enumerate(params["embeds"])]
    x_emb = jnp.concatenate(embs, axis=1)
    n_emb = x_emb.shape[1]
    x = jnp.concatenate([x_emb, x_cont], axis=1).astype(jnp.float32)

    folded, (F0P, F1P, F2P, F3, F3P) = fold_and_pad_params(params, n_emb)

    B = x.shape[0]
    tile_b = 512 if B >= 512 else _round_up(B, SUB)
    Bp = _round_up(B, tile_b)
    x_p = _pad2(x, Bp, F0P, jnp.bfloat16)          # bf16 MXU operand, 1/2 DMA

    kernel = functools.partial(_fused_kernel, f2p=F2P)
    const = lambda i: (0, 0)                        # grid-invariant params
    out = pl.pallas_call(
        kernel,
        grid=(Bp // tile_b,),
        out_shape=jax.ShapeDtypeStruct((Bp, F3P), jnp.float32),
        in_specs=[
            pl.BlockSpec((tile_b, F0P), lambda i: (i, 0)),   # x (batch-tiled)
            pl.BlockSpec((F0P, F1P), const),                 # W0
            pl.BlockSpec((1, F1P), const),                   # b0
            pl.BlockSpec((F1P, 2 * F2P), const),             # [W1b | W1s]
            pl.BlockSpec((1, 2 * F2P), const),               # [b1b | b1s]
            pl.BlockSpec((1, F2P), const),                   # s1b
            pl.BlockSpec((1, F2P), const),                   # t1b
            pl.BlockSpec((F2P, F3P), const),                 # W2
            pl.BlockSpec((1, F3P), const),                   # b2
        ],
        out_specs=pl.BlockSpec((tile_b, F3P), lambda i: (i, 0)),
        compiler_params=pltpu.CompilerParams(
            dimension_semantics=("parallel",)),              # megacore on v7x
    )(x_p, folded["w0"], folded["b0"], folded["wc"], folded["bc"],
      folded["s1"], folded["t1"], folded["w2"], folded["b2"])
    return out[:B, :F3]


# ---------------------------------------------------------------------------
# Parameter init + pure-JAX f32 reference (mirrors the PyTorch eval forward).
# ---------------------------------------------------------------------------
def init_params(key, emb_szs, n_cont, layers, out_sz):
    ks = iter(jax.random.split(key, 64))

    def nrm(shape, s=0.1):
        return jax.random.normal(next(ks), shape, jnp.float32) * s

    def bn(f):
        return dict(gamma=1.0 + nrm((f,)), beta=nrm((f,)),
                    mean=nrm((f,)), var=1.0 + 0.1 * jnp.abs(nrm((f,))))

    p = {}
    p["embeds"] = [nrm((ni, nf), 1.0) for ni, nf in emb_szs]
    n_emb = sum(nf for _, nf in emb_szs)
    p["bn_cont"] = bn(n_cont)
    sizes = [n_emb + n_cont] + layers + [out_sz]
    # block 0: Linear(no bias) -> ReLU -> BN
    p["w0"] = nrm((sizes[0], sizes[1]))
    p["bn0"] = bn(sizes[1])
    # block 1 (BottleneckResidualBlock): branch Linear->ReLU->BN,
    #                                    skip   BN->Linear (size change)
    p["w1b"] = nrm((sizes[1], sizes[2]))
    p["bn1b"] = bn(sizes[2])
    p["bn1s"] = bn(sizes[1])
    p["w1s"] = nrm((sizes[1], sizes[2]))
    # block 2: final Linear with bias
    p["w2"] = nrm((sizes[2], sizes[3]))
    p["b2"] = nrm((1, sizes[3]))
    return p, sizes


def forward_ref(params, x_cat, x_cont):
    embs = [jnp.take(E, x_cat[:, i], axis=0)
            for i, E in enumerate(params["embeds"])]
    x_emb = jnp.concatenate(embs, axis=1)
    cs, ch = bn_fold(**params["bn_cont"])
    xc = x_cont * cs + ch
    x = jnp.concatenate([x_emb, xc], axis=1)
    s0, t0 = bn_fold(**params["bn0"])
    h0 = jnp.maximum(x @ params["w0"], 0.0) * s0 + t0
    s1b, t1b = bn_fold(**params["bn1b"])
    fx = jnp.maximum(h0 @ params["w1b"], 0.0) * s1b + t1b
    s1s, t1s = bn_fold(**params["bn1s"])
    skip = (h0 * s1s + t1s) @ params["w1s"]
    h1 = fx + skip                       # ResidualBlock: fx + (projected) input
    return h1 @ params["w2"] + params["b2"]


if __name__ == "__main__":
    key = jax.random.PRNGKey(0)
    # Small config: 2 categorical cols, 5 continuous, hidden [32, 16], out 3.
    emb_szs = [(5, 3), (8, 4)]
    n_cont, out_sz, layers = 5, 3, [32, 16]
    B = 8

    kp, kc, kd = jax.random.split(key, 3)
    params, sizes = init_params(kp, emb_szs, n_cont, layers, out_sz)

    kcs = jax.random.split(kc, len(emb_szs))
    x_cat = jnp.stack([jax.random.randint(kcs[i], (B,), 0, ni)
                       for i, (ni, _) in enumerate(emb_szs)], axis=1)
    x_cont = jax.random.normal(kd, (B, n_cont), jnp.float32)

    out = forward_pallas(params, x_cat, x_cont)
    out = jax.block_until_ready(out)
    ref = forward_ref(params, x_cat, x_cont)

    assert out.shape == (B, out_sz)
    # bf16 MXU operands (f32 accumulate) vs. pure-f32 reference -> loose tol.
    np.testing.assert_allclose(np.asarray(out), np.asarray(ref),
                               rtol=2e-2, atol=2e-2)
    print("KERNEL_OK")
</pallas_src>

<mosaic_0001>
module attributes {stable_mosaic.version = 11 : i64} {
  func.func @_fused_kernel(%arg0: i32, %arg1: memref<8x128xbf16, #tpu.memory_space<vmem>>, %arg2: memref<128x128xbf16, #tpu.memory_space<vmem>>, %arg3: memref<1x128xf32, #tpu.memory_space<vmem>>, %arg4: memref<128x256xbf16, #tpu.memory_space<vmem>>, %arg5: memref<1x256xf32, #tpu.memory_space<vmem>>, %arg6: memref<1x128xf32, #tpu.memory_space<vmem>>, %arg7: memref<1x128xf32, #tpu.memory_space<vmem>>, %arg8: memref<128x128xbf16, #tpu.memory_space<vmem>>, %arg9: memref<1x128xf32, #tpu.memory_space<vmem>>, %arg10: memref<8x128xf32, #tpu.memory_space<vmem>>) attributes {dimension_semantics = [#tpu.dimension_semantics<parallel>], iteration_bounds = array<i64: 1>, scalar_prefetch = 0 : i64, scratch_operands = 0 : i64, tpu.core_type = #tpu.core_type<tc>, window_params = [{transform_indices = @transform_0, window_bounds = array<i64: 8, 128>}, {pipeline_mode = #tpu.pipeline_mode<synchronous>, transform_indices = @transform_1, window_bounds = array<i64: 128, 128>}, {pipeline_mode = #tpu.pipeline_mode<synchronous>, transform_indices = @transform_2, window_bounds = array<i64: 1, 128>}, {pipeline_mode = #tpu.pipeline_mode<synchronous>, transform_indices = @transform_3, window_bounds = array<i64: 128, 256>}, {pipeline_mode = #tpu.pipeline_mode<synchronous>, transform_indices = @transform_4, window_bounds = array<i64: 1, 256>}, {pipeline_mode = #tpu.pipeline_mode<synchronous>, transform_indices = @transform_5, window_bounds = array<i64: 1, 128>}, {pipeline_mode = #tpu.pipeline_mode<synchronous>, transform_indices = @transform_6, window_bounds = array<i64: 1, 128>}, {pipeline_mode = #tpu.pipeline_mode<synchronous>, transform_indices = @transform_7, window_bounds = array<i64: 128, 128>}, {pipeline_mode = #tpu.pipeline_mode<synchronous>, transform_indices = @transform_8, window_bounds = array<i64: 1, 128>}, {transform_indices = @transform_9, window_bounds = array<i64: 8, 128>}]} {
    %c0 = arith.constant 0 : index
    %c0_0 = arith.constant 0 : index
    %0 = vector.load %arg1[%c0, %c0_0] : memref<8x128xbf16, #tpu.memory_space<vmem>>, vector<8x128xbf16>
    %c0_1 = arith.constant 0 : index
    %c0_2 = arith.constant 0 : index
    %1 = vector.load %arg2[%c0_1, %c0_2] : memref<128x128xbf16, #tpu.memory_space<vmem>>, vector<128x128xbf16>
    %cst = arith.constant dense<0.000000e+00> : vector<8x128xf32>
    %2 = tpu.matmul %0, %1, %cst {dimension_numbers = #tpu.dot_dimension_numbers<[1], [0], [0], [1], [0, 0, 1, 1], [], []>} : vector<8x128xbf16>, vector<128x128xbf16>, vector<8x128xf32> -> vector<8x128xf32>
    %c0_3 = arith.constant 0 : index
    %c0_4 = arith.constant 0 : index
    %3 = vector.load %arg3[%c0_3, %c0_4] : memref<1x128xf32, #tpu.memory_space<vmem>>, vector<1x128xf32>
    %4 = vector.broadcast %3 : vector<1x128xf32> to vector<8x128xf32>
    %5 = arith.addf %2, %4 : vector<8x128xf32>
    %cst_5 = arith.constant 0.000000e+00 : f32
    %6 = vector.broadcast %cst_5 : f32 to vector<8x128xf32>
    %7 = arith.maximumf %5, %6 : vector<8x128xf32>
    %8 = arith.truncf %7 : vector<8x128xf32> to vector<8x128xbf16>
    %c0_6 = arith.constant 0 : index
    %c0_7 = arith.constant 0 : index
    %9 = vector.load %arg4[%c0_6, %c0_7] : memref<128x256xbf16, #tpu.memory_space<vmem>>, vector<128x256xbf16>
    %cst_8 = arith.constant dense<0.000000e+00> : vector<8x256xf32>
    %10 = tpu.matmul %8, %9, %cst_8 {dimension_numbers = #tpu.dot_dimension_numbers<[1], [0], [0], [1], [0, 0, 1, 1], [], []>} : vector<8x128xbf16>, vector<128x256xbf16>, vector<8x256xf32> -> vector<8x256xf32>
    %c0_9 = arith.constant 0 : index
    %c0_10 = arith.constant 0 : index
    %11 = vector.load %arg5[%c0_9, %c0_10] : memref<1x256xf32, #tpu.memory_space<vmem>>, vector<1x256xf32>
    %12 = vector.broadcast %11 : vector<1x256xf32> to vector<8x256xf32>
    %13 = arith.addf %10, %12 : vector<8x256xf32>
    %14 = vector.extract_strided_slice %13 {offsets = [0, 0], sizes = [8, 128], strides = [1, 1]} : vector<8x256xf32> to vector<8x128xf32>
    %15 = vector.extract_strided_slice %13 {offsets = [0, 128], sizes = [8, 128], strides = [1, 1]} : vector<8x256xf32> to vector<8x128xf32>
    %cst_11 = arith.constant 0.000000e+00 : f32
    %16 = vector.broadcast %cst_11 : f32 to vector<8x128xf32>
    %17 = arith.maximumf %14, %16 : vector<8x128xf32>
    %c0_12 = arith.constant 0 : index
    %c0_13 = arith.constant 0 : index
    %18 = vector.load %arg6[%c0_12, %c0_13] : memref<1x128xf32, #tpu.memory_space<vmem>>, vector<1x128xf32>
    %19 = vector.broadcast %18 : vector<1x128xf32> to vector<8x128xf32>
    %20 = arith.mulf %17, %19 : vector<8x128xf32>
    %c0_14 = arith.constant 0 : index
    %c0_15 = arith.constant 0 : index
    %21 = vector.load %arg7[%c0_14, %c0_15] : memref<1x128xf32, #tpu.memory_space<vmem>>, vector<1x128xf32>
    %22 = vector.broadcast %21 : vector<1x128xf32> to vector<8x128xf32>
    %23 = arith.addf %20, %22 : vector<8x128xf32>
    %24 = arith.addf %23, %15 : vector<8x128xf32>
    %25 = arith.truncf %24 : vector<8x128xf32> to vector<8x128xbf16>
    %c0_16 = arith.constant 0 : index
    %c0_17 = arith.constant 0 : index
    %26 = vector.load %arg8[%c0_16, %c0_17] : memref<128x128xbf16, #tpu.memory_space<vmem>>, vector<128x128xbf16>
    %cst_18 = arith.constant dense<0.000000e+00> : vector<8x128xf32>
    %27 = tpu.matmul %25, %26, %cst_18 {dimension_numbers = #tpu.dot_dimension_numbers<[1], [0], [0], [1], [0, 0, 1, 1], [], []>} : vector<8x128xbf16>, vector<128x128xbf16>, vector<8x128xf32> -> vector<8x128xf32>
    %c0_19 = arith.constant 0 : index
    %c0_20 = arith.constant 0 : index
    %28 = vector.load %arg9[%c0_19, %c0_20] : memref<1x128xf32, #tpu.memory_space<vmem>>, vector<1x128xf32>
    %29 = vector.broadcast %28 : vector<1x128xf32> to vector<8x128xf32>
    %30 = arith.addf %27, %29 : vector<8x128xf32>
    %c0_21 = arith.constant 0 : index
    %c0_22 = arith.constant 0 : index
    %31 = vector.load %arg10[%c0_21, %c0_22] : memref<8x128xf32, #tpu.memory_space<vmem>>, vector<8x128xf32>
    tpu.vector_store %arg10[%c0_21, %c0_22], %30 {strides = array<i32>} : memref<8x128xf32, #tpu.memory_space<vmem>>, vector<8x128xf32>,
    return
  }
  func.func @transform_0(%arg0: i32) -> (i32, i32) {
    %c0_i32 = arith.constant 0 : i32
    %c0_i32_0 = arith.constant 0 : i32
    return %arg0, %c0_i32 : i32, i32
  }
  func.func @transform_1(%arg0: i32) -> (i32, i32) {
    %c0_i32 = arith.constant 0 : i32
    %c0_i32_0 = arith.constant 0 : i32
    %c0_i32_1 = arith.constant 0 : i32
    return %c0_i32, %c0_i32_0 : i32, i32
  }
  func.func @transform_2(%arg0: i32) -> (i32, i32) {
    %c0_i32 = arith.constant 0 : i32
    %c0_i32_0 = arith.constant 0 : i32
    %c0_i32_1 = arith.constant 0 : i32
    return %c0_i32, %c0_i32_0 : i32, i32
  }
  func.func @transform_3(%arg0: i32) -> (i32, i32) {
    %c0_i32 = arith.constant 0 : i32
    %c0_i32_0 = arith.constant 0 : i32
    %c0_i32_1 = arith.constant 0 : i32
    return %c0_i32, %c0_i32_0 : i32, i32
  }
  func.func @transform_4(%arg0: i32) -> (i32, i32) {
    %c0_i32 = arith.constant 0 : i32
    %c0_i32_0 = arith.constant 0 : i32
    %c0_i32_1 = arith.constant 0 : i32
    return %c0_i32, %c0_i32_0 : i32, i32
  }
  func.func @transform_5(%arg0: i32) -> (i32, i32) {
    %c0_i32 = arith.constant 0 : i32
    %c0_i32_0 = arith.constant 0 : i32
    %c0_i32_1 = arith.constant 0 : i32
    return %c0_i32, %c0_i32_0 : i32, i32
  }
  func.func @transform_6(%arg0: i32) -> (i32, i32) {
    %c0_i32 = arith.constant 0 : i32
    %c0_i32_0 = arith.constant 0 : i32
    %c0_i32_1 = arith.constant 0 : i32
    return %c0_i32, %c0_i32_0 : i32, i32
  }
  func.func @transform_7(%arg0: i32) -> (i32, i32) {
    %c0_i32 = arith.constant 0 : i32
    %c0_i32_0 = arith.constant 0 : i32
    %c0_i32_1 = arith.constant 0 : i32
    return %c0_i32, %c0_i32_0 : i32, i32
  }
  func.func @transform_8(%arg0: i32) -> (i32, i32) {
    %c0_i32 = arith.constant 0 : i32
    %c0_i32_0 = arith.constant 0 : i32
    %c0_i32_1 = arith.constant 0 : i32
    return %c0_i32, %c0_i32_0 : i32, i32
  }
  func.func @transform_9(%arg0: i32) -> (i32, i32) {
    %c0_i32 = arith.constant 0 : i32
    %c0_i32_0 = arith.constant 0 : i32
    return %arg0, %c0_i32 : i32, i32
  }
}

</mosaic_0001>

<llo_original>
// kernel: tpu_custom_call.1
$region0: #{tpu_custom_call.1}
  #allocation0 [shape = 'u32[]', space=smem, size = 0x4, offset = 0x4, fixed_abs, tag = 'smem constant byte address 0x4 - core index']
  #allocation1 [shape = 'u32[144,128]{1,0:T(1,128)}', space=vmem, size = 0x12000, scoped, tag = 'internal scratch']
  %s0 = inlined_call_operand.hbm [shape: bf16[8,128], index: 0, kind: input, shape index: {}]
  %s1 = inlined_call_operand.hbm [shape: bf16[128,128], index: 1, kind: input, shape index: {}]
  %s2 = inlined_call_operand.vmem [shape: f32[1,128], index: 2, kind: input, shape index: {}]
  %s3 = inlined_call_operand.hbm [shape: bf16[128,256], index: 3, kind: input, shape index: {}]
  %s4 = inlined_call_operand.vmem [shape: f32[1,256], index: 4, kind: input, shape index: {}]
  %s5 = inlined_call_operand.vmem [shape: f32[1,128], index: 5, kind: input, shape index: {}]
  %s6 = inlined_call_operand.vmem [shape: f32[1,128], index: 6, kind: input, shape index: {}]
  %s7 = inlined_call_operand.hbm [shape: bf16[128,128], index: 7, kind: input, shape index: {}]
  %s8 = inlined_call_operand.vmem [shape: f32[1,128], index: 8, kind: input, shape index: {}]
  %s9 = inlined_call_operand.hbm [shape: f32[8,128], index: 9, kind: output, shape index: {}]
  %s10 = sld [smem:[#allocation0]]
  $region62: #{tpu_custom_call.1} parent=0
    _
  %s12 = ssub.s32 1, %s10
  %s13 = scalar_select 0, %s12, %s10
  $region1: #{tpu_custom_call.1} parent=0
    #allocation2 [shape = 'u8[2048]{0}', space=vmem, size = 0x800, scoped, tag = 'input window, operand 0, single buffered']
    #allocation3 [shape = 's32[1]{0}', space=sflag, size = 0x4, scoped, tag = 'scoped memory for tpu_custom_call.1']
    #allocation4 [shape = 's32[1]{0}', space=sflag, size = 0x4, scoped, tag = 'scoped memory for tpu_custom_call.1']
    #allocation5 [shape = 'u8[32768]{0}', space=vmem, size = 0x8000, scoped, tag = 'input window, operand 1, single buffered']
    #allocation6 [shape = 's32[1]{0}', space=sflag, size = 0x4, scoped, tag = 'scoped memory for tpu_custom_call.1']
    #allocation7 [shape = 'u8[65536]{0}', space=vmem, size = 0x10000, scoped, tag = 'input window, operand 3, single buffered']
    #allocation8 [shape = 'u8[32768]{0}', space=vmem, size = 0x8000, scoped, tag = 'input window, operand 7, single buffered']
    #allocation9 [shape = 's32[1]{0}', space=sflag, size = 0x4, scoped, tag = 'scoped memory for tpu_custom_call.1']
    #allocation10 [shape = 'u8[4096]{0}', space=vmem, size = 0x1000, scoped, tag = 'output window, operand 0, single buffered']
    %14 = vsyncpa [#allocation3], 0
    %15 = vsyncpa [#allocation6], 0
    %16 = vsyncpa [#allocation9], 0
    %17 = vsyncpa [#allocation4], 0
    // Predicated region
    $region2: #{tpu_custom_call.1} parent=1 // pred_check
      _
    $region3: #{tpu_custom_call.1} parent=1 // pred_check_branch
      %19 = sbr.rel (0) target = $region5
    $region4: #{tpu_custom_call.1} parent=1 // pred_region
      %s21 = ssub.s32 64, 64
      %22 = vsyncadd [#allocation3], %s21
      %s24 = sshll.u32 [#allocation2], 4
      %s25 = int_to_ptr.vmem [resolvable:$true] %s24
      %27 = dma.hbm_to_vmem [thread:$0]  %s0, 64, %s25, [#allocation3]
    $region5: #{tpu_custom_call.1} parent=1 // pred_fallthru
      _
    // Predicated region
    $region6: #{tpu_custom_call.1} parent=1 // pred_check
      _
    $region7: #{tpu_custom_call.1} parent=1 // pred_check_branch
      %29 = sbr.rel (0) target = $region9
    $region8: #{tpu_custom_call.1} parent=1 // pred_region
      %s31 = ssub.s32 1024, 1024
      %32 = vsyncadd [#allocation6], %s31
      %s33 = sshll.u32 [#allocation5], 4
      %s34 = int_to_ptr.vmem [resolvable:$true] %s33
      %39 = dma.hbm_to_vmem [thread:$0]  %s1, 1024, %s34, [#allocation6], 64, 64, 4
    $region9: #{tpu_custom_call.1} parent=1 // pred_fallthru
      _
    // Predicated region
    $region10: #{tpu_custom_call.1} parent=1 // pred_check
      _
    $region11: #{tpu_custom_call.1} parent=1 // pred_check_branch
      %41 = sbr.rel (0) target = $region13
    $region12: #{tpu_custom_call.1} parent=1 // pred_region
      _
    $region13: #{tpu_custom_call.1} parent=1 // pred_fallthru
      _
    // Predicated region
    $region14: #{tpu_custom_call.1} parent=1 // pred_check
      _
    $region15: #{tpu_custom_call.1} parent=1 // pred_check_branch
      %43 = sbr.rel (0) target = $region17
    $region16: #{tpu_custom_call.1} parent=1 // pred_region
      %s45 = ssub.s32 2048, 2048
      %46 = vsyncadd [#allocation6], %s45
      %s47 = sshll.u32 [#allocation7], 4
      %s48 = int_to_ptr.vmem [resolvable:$true] %s47
      %53 = dma.hbm_to_vmem [thread:$0]  %s3, 2048, %s48, [#allocation6], 128, 128, 8
    $region17: #{tpu_custom_call.1} parent=1 // pred_fallthru
      _
    // Predicated region
    $region18: #{tpu_custom_call.1} parent=1 // pred_check
      _
    $region19: #{tpu_custom_call.1} parent=1 // pred_check_branch
      %55 = sbr.rel (0) target = $region21
    $region20: #{tpu_custom_call.1} parent=1 // pred_region
      _
    $region21: #{tpu_custom_call.1} parent=1 // pred_fallthru
      _
    // Predicated region
    $region22: #{tpu_custom_call.1} parent=1 // pred_check
      _
    $region23: #{tpu_custom_call.1} parent=1 // pred_check_branch
      %57 = sbr.rel (0) target = $region25
    $region24: #{tpu_custom_call.1} parent=1 // pred_region
      _
    $region25: #{tpu_custom_call.1} parent=1 // pred_fallthru
      _
    // Predicated region
    $region26: #{tpu_custom_call.1} parent=1 // pred_check
      _
    $region27: #{tpu_custom_call.1} parent=1 // pred_check_branch
      %59 = sbr.rel (0) target = $region29
    $region28: #{tpu_custom_call.1} parent=1 // pred_region
      _
    $region29: #{tpu_custom_call.1} parent=1 // pred_fallthru
      _
    // Predicated region
    $region30: #{tpu_custom_call.1} parent=1 // pred_check
      _
    $region31: #{tpu_custom_call.1} parent=1 // pred_check_branch
      %61 = sbr.rel (0) target = $region33
    $region32: #{tpu_custom_call.1} parent=1 // pred_region
      %s63 = ssub.s32 1024, 1024
      %64 = vsyncadd [#allocation9], %s63
      %s65 = sshll.u32 [#allocation8], 4
      %s66 = int_to_ptr.vmem [resolvable:$true] %s65
      %71 = dma.hbm_to_vmem [thread:$0]  %s7, 1024, %s66, [#allocation9], 64, 64, 4
    $region33: #{tpu_custom_call.1} parent=1 // pred_fallthru
      _
    // Predicated region
    $region34: #{tpu_custom_call.1} parent=1 // pred_check
      _
    $region35: #{tpu_custom_call.1} parent=1 // pred_check_branch
      %73 = sbr.rel (0) target = $region37
    $region36: #{tpu_custom_call.1} parent=1 // pred_region
      _
    $region37: #{tpu_custom_call.1} parent=1 // pred_fallthru
      _
    // Predicated region
    $region38: #{tpu_custom_call.1} parent=1 // pred_check
      _
    $region39: #{tpu_custom_call.1} parent=1 // pred_check_branch
      %75 = sbr.rel (0) target = $region41
    $region40: #{tpu_custom_call.1} parent=1 // pred_region
      %76 = dma.done [#allocation3], 64
    $region41: #{tpu_custom_call.1} parent=1 // pred_fallthru
      _
    // Predicated region
    $region42: #{tpu_custom_call.1} parent=1 // pred_check
      _
    $region43: #{tpu_custom_call.1} parent=1 // pred_check_branch
      %78 = sbr.rel (0) target = $region45
    $region44: #{tpu_custom_call.1} parent=1 // pred_region
      %79 = dma.done [#allocation6], 1024
    $region45: #{tpu_custom_call.1} parent=1 // pred_fallthru
      _
    // Predicated region
    $region46: #{tpu_custom_call.1} parent=1 // pred_check
      _
    $region47: #{tpu_custom_call.1} parent=1 // pred_check_branch
      %81 = sbr.rel (0) target = $region49
    $region48: #{tpu_custom_call.1} parent=1 // pred_region
      %82 = dma.done [#allocation6], 2048
    $region49: #{tpu_custom_call.1} parent=1 // pred_fallthru
      _
    // Predicated region
    $region50: #{tpu_custom_call.1} parent=1 // pred_check
      _
    $region51: #{tpu_custom_call.1} parent=1 // pred_check_branch
      %84 = sbr.rel (0) target = $region53
    $region52: #{tpu_custom_call.1} parent=1 // pred_region
      %85 = dma.done [#allocation9], 1024
    $region53: #{tpu_custom_call.1} parent=1 // pred_fallthru
      _
    %v87 = vld [vmem:[#allocation2] sm:$0xf]
    %v88 = vld [vmem:[#allocation5] sm:$0xf]
    %v89 = vld [vmem:[#allocation5 + $0x4] sm:$0xf]
    %v90 = vld [vmem:[#allocation5 + $0x8] sm:$0xf]
    %v91 = vld [vmem:[#allocation5 + $0xc] sm:$0xf]
    %v92 = vld [vmem:[#allocation5 + $0x10] sm:$0xf]
    %v93 = vld [vmem:[#allocation5 + $0x14] sm:$0xf]
    %v94 = vld [vmem:[#allocation5 + $0x18] sm:$0xf]
    %v95 = vld [vmem:[#allocation5 + $0x1c] sm:$0xf]
    %v96 = vld [vmem:[#allocation5 + $0x20] sm:$0xf]
    %v97 = vld [vmem:[#allocation5 + $0x24] sm:$0xf]
    %v98 = vld [vmem:[#allocation5 + $0x28] sm:$0xf]
    %v99 = vld [vmem:[#allocation5 + $0x2c] sm:$0xf]
    %v100 = vld [vmem:[#allocation5 + $0x30] sm:$0xf]
    %v101 = vld [vmem:[#allocation5 + $0x34] sm:$0xf]
    %v102 = vld [vmem:[#allocation5 + $0x38] sm:$0xf]
    %v103 = vld [vmem:[#allocation5 + $0x3c] sm:$0xf]
    %v104 = vld [vmem:[%s2] sm:$0x1]
    %v106 = vlaneseq
    %v107 = vshrl.u32 %v106, 7
    %v108 = vsub.s32 0, %v107
    %v109 = vrot.slane %v104, %v108
    %v127 = vunpack.c.l.b16 %v88
    %v128 = vunpack.c.l.b16 %v89
    %v129 = vunpack.c.l.b16 %v90
    %v130 = vunpack.c.l.b16 %v91
    %v131 = vunpack.c.l.b16 %v92
    %v132 = vunpack.c.l.b16 %v93
    %v133 = vunpack.c.l.b16 %v94
    %v134 = vunpack.c.l.b16 %v95
    %v135 = vunpack.c.l.b16 %v96
    %v136 = vunpack.c.l.b16 %v97
    %v137 = vunpack.c.l.b16 %v98
    %v138 = vunpack.c.l.b16 %v99
    %v139 = vunpack.c.l.b16 %v100
    %v140 = vunpack.c.l.b16 %v101
    %v141 = vunpack.c.l.b16 %v102
    %v142 = vunpack.c.l.b16 %v103
    %v143 = vpack.c.b16 %v128, %v127
    %v144 = vpack.c.b16 %v130, %v129
    %v145 = vpack.c.b16 %v132, %v131
    %v146 = vpack.c.b16 %v134, %v133
    %v147 = vpack.c.b16 %v136, %v135
    %v148 = vpack.c.b16 %v138, %v137
    %v149 = vpack.c.b16 %v140, %v139
    %v150 = vpack.c.b16 %v142, %v141
    %159 = vmatprep.subr.bf16.mxu0 0
    %160 = vmatpush1.bf16.msra.mxu0 %v143
    %161 = vmatprep.subr.bf16.mxu0 0
    %162 = vmatpush1.bf16.msra.mxu0 %v144
    %163 = vmatprep.subr.bf16.mxu0 0
    %164 = vmatpush1.bf16.msra.mxu0 %v145
    %165 = vmatprep.subr.bf16.mxu0 0
    %166 = vmatpush1.bf16.msra.mxu0 %v146
    %167 = vmatprep.subr.bf16.mxu0 0
    %168 = vmatpush1.bf16.msra.mxu0 %v147
    %169 = vmatprep.subr.bf16.mxu0 0
    %170 = vmatpush1.bf16.msra.mxu0 %v148
    %171 = vmatprep.subr.bf16.mxu0 0
    %172 = vmatpush1.bf16.msra.mxu0 %v149
    %173 = vmatprep.subr.bf16.mxu0 0
    %174 = vmatpush1.bf16.msra.mxu0 %v150
    %175 = vmatprep.subr.bf16.mxu0 0
    %176 = vmatpush1.bf16.msra.mxu0 0
    %177 = vmatprep.subr.bf16.mxu0 0
    %178 = vmatpush1.bf16.msra.mxu0 0
    %179 = vmatprep.subr.bf16.mxu0 0
    %180 = vmatpush1.bf16.msra.mxu0 0
    %181 = vmatprep.subr.bf16.mxu0 0
    %182 = vmatpush1.bf16.msra.mxu0 0
    %183 = vmatprep.subr.bf16.mxu0 0
    %184 = vmatpush1.bf16.msra.mxu0 0
    %185 = vmatprep.subr.bf16.mxu0 0
    %186 = vmatpush1.bf16.msra.mxu0 0
    %187 = vmatprep.subr.bf16.mxu0 0
    %188 = vmatpush1.bf16.msra.mxu0 0
    %189 = vmatprep.subr.bf16.mxu0 0
    %190 = vmatpush1.bf16.msra.mxu0 0
    %191 = vmatprep.mubr.bf16.mxu0 0
    %192 = vmatmul.mubr.bf16.gmra.mrb[0].mxu0 %v87
    %v193 = vpop.f32.mrb[0].mxu0
    %v194 = vadd.f32 %v109, %v193
    %v195 = vpop.f32.mrb[0].mxu0
    %v196 = vpop.f32.mrb[0].mxu0
    %v197 = vpop.f32.mrb[0].mxu0
    %198 = vdwg.mxu0
    %v199 = vmax.f32 %v194, 0.0
    %v200 = vpack.c.bf16 %v199, %v199
    %v201 = vld [vmem:[#allocation7] sm:$0xff]
    %v202 = vld [vmem:[#allocation7 + $0x8] sm:$0xff]
    %v203 = vld [vmem:[#allocation7 + $0x10] sm:$0xff]
    %v204 = vld [vmem:[#allocation7 + $0x18] sm:$0xff]
    %v205 = vld [vmem:[#allocation7 + $0x20] sm:$0xff]
    %v206 = vld [vmem:[#allocation7 + $0x28] sm:$0xff]
    %v207 = vld [vmem:[#allocation7 + $0x30] sm:$0xff]
    %v208 = vld [vmem:[#allocation7 + $0x38] sm:$0xff]
    %v209 = vld [vmem:[#allocation7 + $0x40] sm:$0xff]
    %v210 = vld [vmem:[#allocation7 + $0x48] sm:$0xff]
    %v211 = vld [vmem:[#allocation7 + $0x50] sm:$0xff]
    %v212 = vld [vmem:[#allocation7 + $0x58] sm:$0xff]
    %v213 = vld [vmem:[#allocation7 + $0x60] sm:$0xff]
    %v214 = vld [vmem:[#allocation7 + $0x68] sm:$0xff]
    %v215 = vld [vmem:[#allocation7 + $0x70] sm:$0xff]
    %v216 = vld [vmem:[#allocation7 + $0x78] sm:$0xff]
    %v217 = vld [vmem:[%s4] sm:$0x3]
    %v219 = vlaneseq
    %v220 = vshrl.u32 %v219, 7
    %v221 = vsub.s32 0, %v220
    %v222 = vrot.slane %v217, %v221
    %v223 = vlaneseq
    %v224 = vshrl.u32 %v223, 7
    %v225 = vsub.s32 1, %v224
    %v226 = vrot.slane %v217, %v225
    %v245 = vunpack.c.l.b16 %v201
    %v246 = vunpack.c.h.b16 %v201
    %v247 = vunpack.c.l.b16 %v202
    %v248 = vunpack.c.h.b16 %v202
    %v249 = vunpack.c.l.b16 %v203
    %v250 = vunpack.c.h.b16 %v203
    %v251 = vunpack.c.l.b16 %v204
    %v252 = vunpack.c.h.b16 %v204
    %v253 = vunpack.c.l.b16 %v205
    %v254 = vunpack.c.h.b16 %v205
    %v255 = vunpack.c.l.b16 %v206
    %v256 = vunpack.c.h.b16 %v206
    %v257 = vunpack.c.l.b16 %v207
    %v258 = vunpack.c.h.b16 %v207
    %v259 = vunpack.c.l.b16 %v208
    %v260 = vunpack.c.h.b16 %v208
    %v261 = vunpack.c.l.b16 %v209
    %v262 = vunpack.c.h.b16 %v209
    %v263 = vunpack.c.l.b16 %v210
    %v264 = vunpack.c.h.b16 %v210
    %v265 = vunpack.c.l.b16 %v211
    %v266 = vunpack.c.h.b16 %v211
    %v267 = vunpack.c.l.b16 %v212
    %v268 = vunpack.c.h.b16 %v212
    %v269 = vunpack.c.l.b16 %v213
    %v270 = vunpack.c.h.b16 %v213
    %v271 = vunpack.c.l.b16 %v214
    %v272 = vunpack.c.h.b16 %v214
    %v273 = vunpack.c.l.b16 %v215
    %v274 = vunpack.c.h.b16 %v215
    %v275 = vunpack.c.l.b16 %v216
    %v276 = vunpack.c.h.b16 %v216
    %v277 = vpack.c.b16 %v247, %v245
    %v278 = vpack.c.b16 %v248, %v246
    %v279 = vpack.c.b16 %v251, %v249
    %v280 = vpack.c.b16 %v252, %v250
    %v281 = vpack.c.b16 %v255, %v253
    %v282 = vpack.c.b16 %v256, %v254
    %v283 = vpack.c.b16 %v259, %v257
    %v284 = vpack.c.b16 %v260, %v258
    %v285 = vpack.c.b16 %v263, %v261
    %v286 = vpack.c.b16 %v264, %v262
    %v287 = vpack.c.b16 %v267, %v265
    %v288 = vpack.c.b16 %v268, %v266
    %v289 = vpack.c.b16 %v271, %v269
    %v290 = vpack.c.b16 %v272, %v270
    %v291 = vpack.c.b16 %v275, %v273
    %v292 = vpack.c.b16 %v276, %v274
    %309 = vmatprep.subr.bf16.mxu0 %v278
    %310 = vmatpush1.bf16.msra.mxu0 %v277
    %311 = vmatprep.subr.bf16.mxu0 %v280
    %312 = vmatpush1.bf16.msra.mxu0 %v279
    %313 = vmatprep.subr.bf16.mxu0 %v282
    %314 = vmatpush1.bf16.msra.mxu0 %v281
    %315 = vmatprep.subr.bf16.mxu0 %v284
    %316 = vmatpush1.bf16.msra.mxu0 %v283
    %317 = vmatprep.subr.bf16.mxu0 %v286
    %318 = vmatpush1.bf16.msra.mxu0 %v285
    %319 = vmatprep.subr.bf16.mxu0 %v288
    %320 = vmatpush1.bf16.msra.mxu0 %v287
    %321 = vmatprep.subr.bf16.mxu0 %v290
    %322 = vmatpush1.bf16.msra.mxu0 %v289
    %323 = vmatprep.subr.bf16.mxu0 %v292
    %324 = vmatpush1.bf16.msra.mxu0 %v291
    %325 = vmatprep.subr.bf16.mxu0 0
    %326 = vmatpush1.bf16.msra.mxu0 0
    %327 = vmatprep.subr.bf16.mxu0 0
    %328 = vmatpush1.bf16.msra.mxu0 0
    %329 = vmatprep.subr.bf16.mxu0 0
    %330 = vmatpush1.bf16.msra.mxu0 0
    %331 = vmatprep.subr.bf16.mxu0 0
    %332 = vmatpush1.bf16.msra.mxu0 0
    %333 = vmatprep.subr.bf16.mxu0 0
    %334 = vmatpush1.bf16.msra.mxu0 0
    %335 = vmatprep.subr.bf16.mxu0 0
    %336 = vmatpush1.bf16.msra.mxu0 0
    %337 = vmatprep.subr.bf16.mxu0 0
    %338 = vmatpush1.bf16.msra.mxu0 0
    %339 = vmatprep.subr.bf16.mxu0 0
    %340 = vmatpush1.bf16.msra.mxu0 0
    %341 = vmatprep.mubr.bf16.mxu0 0
    %342 = vmatmul.mubr.bf16.gmra.mrb[0].mxu0 %v200
    %v343 = vpop.f32.mrb[0].mxu0
    %v344 = vadd.f32 %v222, %v343
    %v345 = vpop.f32.mrb[0].mxu0
    %v346 = vadd.f32 %v226, %v345
    %v347 = vpop.f32.mrb[0].mxu0
    %v348 = vpop.f32.mrb[0].mxu0
    %349 = vdwg.mxu0
    %v350 = vmax.f32 %v344, 0.0
    %v351 = vld [vmem:[%s5] sm:$0x1]
    %v353 = vlaneseq
    %v354 = vshrl.u32 %v353, 7
    %v355 = vsub.s32 0, %v354
    %v356 = vrot.slane %v351, %v355
    %v358 = vmul.f32 %v350, %v356
    %v359 = vld [vmem:[%s6] sm:$0x1]
    %v361 = vlaneseq
    %v362 = vshrl.u32 %v361, 7
    %v363 = vsub.s32 0, %v362
    %v364 = vrot.slane %v359, %v363
    %v366 = vadd.f32 %v358, %v364
    %v367 = vadd.f32 %v366, %v346
    %v368 = vpack.c.bf16 %v367, %v367
    %v369 = vld [vmem:[#allocation8] sm:$0xf]
    %v370 = vld [vmem:[#allocation8 + $0x4] sm:$0xf]
    %v371 = vld [vmem:[#allocation8 + $0x8] sm:$0xf]
    %v372 = vld [vmem:[#allocation8 + $0xc] sm:$0xf]
    %v373 = vld [vmem:[#allocation8 + $0x10] sm:$0xf]
    %v374 = vld [vmem:[#allocation8 + $0x14] sm:$0xf]
    %v375 = vld [vmem:[#allocation8 + $0x18] sm:$0xf]
    %v376 = vld [vmem:[#allocation8 + $0x1c] sm:$0xf]
    %v377 = vld [vmem:[#allocation8 + $0x20] sm:$0xf]
    %v378 = vld [vmem:[#allocation8 + $0x24] sm:$0xf]
    %v379 = vld [vmem:[#allocation8 + $0x28] sm:$0xf]
    %v380 = vld [vmem:[#allocation8 + $0x2c] sm:$0xf]
    %v381 = vld [vmem:[#allocation8 + $0x30] sm:$0xf]
    %v382 = vld [vmem:[#allocation8 + $0x34] sm:$0xf]
    %v383 = vld [vmem:[#allocation8 + $0x38] sm:$0xf]
    %v384 = vld [vmem:[#allocation8 + $0x3c] sm:$0xf]
    %v385 = vld [vmem:[%s8] sm:$0x1]
    %v387 = vlaneseq
    %v388 = vshrl.u32 %v387, 7
    %v389 = vsub.s32 0, %v388
    %v390 = vrot.slane %v385, %v389
    %v408 = vunpack.c.l.b16 %v369
    %v409 = vunpack.c.l.b16 %v370
    %v410 = vunpack.c.l.b16 %v371
    %v411 = vunpack.c.l.b16 %v372
    %v412 = vunpack.c.l.b16 %v373
    %v413 = vunpack.c.l.b16 %v374
    %v414 = vunpack.c.l.b16 %v375
    %v415 = vunpack.c.l.b16 %v376
    %v416 = vunpack.c.l.b16 %v377
    %v417 = vunpack.c.l.b16 %v378
    %v418 = vunpack.c.l.b16 %v379
    %v419 = vunpack.c.l.b16 %v380
    %v420 = vunpack.c.l.b16 %v381
    %v421 = vunpack.c.l.b16 %v382
    %v422 = vunpack.c.l.b16 %v383
    %v423 = vunpack.c.l.b16 %v384
    %v424 = vpack.c.b16 %v409, %v408
    %v425 = vpack.c.b16 %v411, %v410
    %v426 = vpack.c.b16 %v413, %v412
    %v427 = vpack.c.b16 %v415, %v414
    %v428 = vpack.c.b16 %v417, %v416
    %v429 = vpack.c.b16 %v419, %v418
    %v430 = vpack.c.b16 %v421, %v420
    %v431 = vpack.c.b16 %v423, %v422
    %440 = vmatprep.subr.bf16.mxu0 0
    %441 = vmatpush1.bf16.msra.mxu0 %v424
    %442 = vmatprep.subr.bf16.mxu0 0
    %443 = vmatpush1.bf16.msra.mxu0 %v425
    %444 = vmatprep.subr.bf16.mxu0 0
    %445 = vmatpush1.bf16.msra.mxu0 %v426
    %446 = vmatprep.subr.bf16.mxu0 0
    %447 = vmatpush1.bf16.msra.mxu0 %v427
    %448 = vmatprep.subr.bf16.mxu0 0
    %449 = vmatpush1.bf16.msra.mxu0 %v428
    %450 = vmatprep.subr.bf16.mxu0 0
    %451 = vmatpush1.bf16.msra.mxu0 %v429
    %452 = vmatprep.subr.bf16.mxu0 0
    %453 = vmatpush1.bf16.msra.mxu0 %v430
    %454 = vmatprep.subr.bf16.mxu0 0
    %455 = vmatpush1.bf16.msra.mxu0 %v431
    %456 = vmatprep.subr.bf16.mxu0 0
    %457 = vmatpush1.bf16.msra.mxu0 0
    %458 = vmatprep.subr.bf16.mxu0 0
    %459 = vmatpush1.bf16.msra.mxu0 0
    %460 = vmatprep.subr.bf16.mxu0 0
    %461 = vmatpush1.bf16.msra.mxu0 0
    %462 = vmatprep.subr.bf16.mxu0 0
    %463 = vmatpush1.bf16.msra.mxu0 0
    %464 = vmatprep.subr.bf16.mxu0 0
    %465 = vmatpush1.bf16.msra.mxu0 0
    %466 = vmatprep.subr.bf16.mxu0 0
    %467 = vmatpush1.bf16.msra.mxu0 0
    %468 = vmatprep.subr.bf16.mxu0 0
    %469 = vmatpush1.bf16.msra.mxu0 0
    %470 = vmatprep.subr.bf16.mxu0 0
    %471 = vmatpush1.bf16.msra.mxu0 0
    %472 = vmatprep.mubr.bf16.mxu0 0
    %473 = vmatmul.mubr.bf16.gmra.mrb[0].mxu0 %v368
    %v474 = vpop.f32.mrb[0].mxu0
    %v475 = vadd.f32 %v390, %v474
    %v476 = vpop.f32.mrb[0].mxu0
    %v477 = vpop.f32.mrb[0].mxu0
    %v478 = vpop.f32.mrb[0].mxu0
    %479 = vdwg.mxu0
    %480 = vst [vmem:[#allocation10] sm:$0xff] %v475
    // Predicated region
    $region54: #{tpu_custom_call.1} parent=1 // pred_check
      _
    $region55: #{tpu_custom_call.1} parent=1 // pred_check_branch
      %482 = sbr.rel (0) target = $region57
    $region56: #{tpu_custom_call.1} parent=1 // pred_region
      %s484 = ssub.s32 128, 128
      %485 = vsyncadd [#allocation4], %s484
      %s487 = sshll.u32 [#allocation10], 4
      %s488 = int_to_ptr.vmem [resolvable:$true] %s487
      %490 = dma.vmem_to_hbm [thread:$0]  %s488, 128, %s9, [#allocation4]
    $region57: #{tpu_custom_call.1} parent=1 // pred_fallthru
      _
    // Predicated region
    $region58: #{tpu_custom_call.1} parent=1 // pred_check
      _
    $region59: #{tpu_custom_call.1} parent=1 // pred_check_branch
      %492 = sbr.rel (0) target = $region61
    $region60: #{tpu_custom_call.1} parent=1 // pred_region
      %493 = dma.done [#allocation4], 128
    $region61: #{tpu_custom_call.1} parent=1 // pred_fallthru
      _
    %494 = vsyncpa [#allocation3], 1
    %495 = vsyncpa [#allocation6], 1
    %496 = vsyncpa [#allocation9], 1
    %497 = vsyncpa [#allocation4], 1

</llo_original>
